<compile_context>
chip_gen: v7x
topology: tpu7x:2x2x1
jax: 0.10.0
libtpu: 0.0.40
codegen_flags: <defaults>
</compile_context>

<pallas_src>
import functools

import jax
import jax.numpy as jnp
from jax.experimental import pallas as pl
from jax.experimental.pallas import tpu as pltpu

NUM_POS_FEATS = 32   # num_pos_feats (scaled down from 256 for the example)
TABLE_SIZE = 50      # nn.Embedding(50, num_pos_feats)


def _pos_embed_kernel(col_ref, row_ref, out_ref):
    # Grid step 0 writes channels [0, F)   (col half of the concat),
    # grid step 1 writes channels [F, 2F)  (row half).
    #
    # col_ref: (F, 1, W) = col_embed.weight[:W].T[:, None, :]
    # row_ref: (F, H, 1) = row_embed.weight[:H].T[:, :, None]
    # out_ref: (F, H, W) block of the (2F, H, W) output slab
    F, H, W = out_ref.shape
    half = pl.program_id(0)

    @pl.when(half == 0)
    def _():
        # pos[c, h, w] = col_embed[w, c]: sublane-broadcast (F,1,W) -> (F,H,W),
        # one whole-block store.
        out_ref[...] = jnp.broadcast_to(col_ref[...], (F, H, W))

    @pl.when(half == 1)
    def _():
        # pos[F+c, h, w] = row_embed[h, c]: lane-broadcast (F,H,1) -> (F,H,W),
        # one whole-block store.
        out_ref[...] = jnp.broadcast_to(row_ref[...], (F, H, W))


@functools.partial(jax.jit, static_argnums=(2, 3))
def position_embedding_slab(col_weight, row_weight, H, W):
    """Batch-independent position-embedding slab, shape (2F, H, W).

    Written by the kernel already in the module's final channel layout, so no
    post-kernel relayout is needed.
    """
    F = col_weight.shape[1]
    # nn.Embedding would raise on out-of-range indices; VMEM has no runtime
    # bounds check, so enforce the 50-entry table contract at trace time.
    assert W <= col_weight.shape[0] and H <= row_weight.shape[0], (
        "spatial dims exceed the 50-entry embedding tables")

    # Only wrapper-side data movement: two <=(50,F) (~50 KB) table relayouts
    # into exactly the layouts that make the kernel pure whole-tile broadcast
    # stores (fused into this jit, negligible vs the slab writeback).
    col3 = col_weight[:W].T[:, None, :]      # (F, 1, W)
    row3 = row_weight[:H].T[:, :, None]      # (F, H, 1)

    return pl.pallas_call(
        _pos_embed_kernel,
        out_shape=jax.ShapeDtypeStruct((2 * F, H, W), col_weight.dtype),
        grid=(2,),  # one step per channel half; parallel -> split across v7x TCs
        in_specs=[
            pl.BlockSpec((F, 1, W), lambda i: (0, 0, 0)),   # col table (resident)
            pl.BlockSpec((F, H, 1), lambda i: (0, 0, 0)),   # row table (resident)
        ],
        out_specs=pl.BlockSpec((F, H, W), lambda i: (i, 0, 0)),
        compiler_params=pltpu.CompilerParams(
            dimension_semantics=("parallel",)),
    )(col3, row3)


def position_embedding_learned(x, col_weight, row_weight):
    """x: (B, C, H, W); only its shape is used (as in the PyTorch forward).

    Returns the learned position embedding (B, 2*F, H, W), matching the
    PyTorch module exactly. The batch broadcast is kept lazy (outside the
    kernel / slab jit) so it fuses into downstream consumers instead of
    writing B identical copies to HBM.
    """
    B, _, H, W = x.shape
    F = col_weight.shape[1]
    pos = position_embedding_slab(col_weight, row_weight, H, W)   # (2F, H, W)
    return jnp.broadcast_to(pos[None], (B, 2 * F, H, W))


def reference(x, col_weight, row_weight):
    """Pure-JAX reference mirroring the PyTorch forward exactly."""
    B, _, H, W = x.shape
    F = col_weight.shape[1]
    x_emb = col_weight[:W]                                    # (W, F)
    y_emb = row_weight[:H]                                    # (H, F)
    pos = jnp.concatenate(
        [jnp.broadcast_to(x_emb[None, :, :], (H, W, F)),
         jnp.broadcast_to(y_emb[:, None, :], (H, W, F))],
        axis=-1,
    ).transpose(2, 0, 1)[None]                                # (1, 2F, H, W)
    return jnp.broadcast_to(pos, (B, 2 * F, H, W))


if __name__ == "__main__":
    key = jax.random.PRNGKey(0)
    k_x, k_col, k_row = jax.random.split(key, 3)

    # small shapes consistent with the module's forward
    B, C, H, W = 2, 4, 16, 16
    x = jax.random.normal(k_x, (B, C, H, W), dtype=jnp.float32)

    # nn.init.uniform_ on both embedding tables (deterministic in-script init)
    col_weight = jax.random.uniform(k_col, (TABLE_SIZE, NUM_POS_FEATS),
                                    dtype=jnp.float32)
    row_weight = jax.random.uniform(k_row, (TABLE_SIZE, NUM_POS_FEATS),
                                    dtype=jnp.float32)

    pos = jax.block_until_ready(
        position_embedding_learned(x, col_weight, row_weight))
    assert pos.shape == (B, 2 * NUM_POS_FEATS, H, W), pos.shape
    assert jnp.allclose(pos, reference(x, col_weight, row_weight)), \
        "mismatch vs reference (H=16, W=16)"

    # Review follow-up: also exercise spatial dims not divisible by 8
    # (e.g. the real-world W=50) — stores are still whole output blocks,
    # just masked on the ragged lane/sublane edges.
    H2, W2 = 12, 50
    x2 = jax.random.normal(k_x, (B, C, H2, W2), dtype=jnp.float32)
    pos2 = jax.block_until_ready(
        position_embedding_learned(x2, col_weight, row_weight))
    assert pos2.shape == (B, 2 * NUM_POS_FEATS, H2, W2), pos2.shape
    assert jnp.allclose(pos2, reference(x2, col_weight, row_weight)), \
        "mismatch vs reference (H=12, W=50)"

    print("KERNEL_OK")
</pallas_src>

<mosaic_0001>
module attributes {stable_mosaic.version = 11 : i64} {
  func.func @_pos_embed_kernel(%arg0: i32, %arg1: memref<32x1x16xf32, #tpu.memory_space<vmem>>, %arg2: memref<32x16x1xf32, #tpu.memory_space<vmem>>, %arg3: memref<32x16x16xf32, #tpu.memory_space<vmem>>) attributes {dimension_semantics = [#tpu.dimension_semantics<parallel>], iteration_bounds = array<i64: 2>, scalar_prefetch = 0 : i64, scratch_operands = 0 : i64, tpu.core_type = #tpu.core_type<tc>, window_params = [{pipeline_mode = #tpu.pipeline_mode<synchronous>, transform_indices = @transform_0, window_bounds = array<i64: 32, 1, 16>}, {pipeline_mode = #tpu.pipeline_mode<synchronous>, transform_indices = @transform_1, window_bounds = array<i64: 32, 16, 1>}, {transform_indices = @transform_2, window_bounds = array<i64: 32, 16, 16>}]} {
    %c0_i32 = arith.constant 0 : i32
    %0 = arith.cmpi eq, %arg0, %c0_i32 : i32
    %1 = arith.extui %0 : i1 to i32
    %c0_i32_0 = arith.constant 0 : i32
    %2 = arith.cmpi ne, %1, %c0_i32_0 : i32
    scf.if %2 {
      %c0 = arith.constant 0 : index
      %c0_2 = arith.constant 0 : index
      %c0_3 = arith.constant 0 : index
      %6 = vector.load %arg1[%c0, %c0_2, %c0_3] : memref<32x1x16xf32, #tpu.memory_space<vmem>>, vector<32x1x16xf32>
      %7 = vector.shape_cast %6 : vector<32x1x16xf32> to vector<32x1x16xf32>
      %8 = vector.broadcast %7 : vector<32x1x16xf32> to vector<32x16x16xf32>
      %c0_4 = arith.constant 0 : index
      %c0_5 = arith.constant 0 : index
      %c0_6 = arith.constant 0 : index
      %9 = vector.load %arg3[%c0_4, %c0_5, %c0_6] : memref<32x16x16xf32, #tpu.memory_space<vmem>>, vector<32x16x16xf32>
      tpu.vector_store %arg3[%c0_4, %c0_5, %c0_6], %8 {strides = array<i32>} : memref<32x16x16xf32, #tpu.memory_space<vmem>>, vector<32x16x16xf32>,
    } else {
    }
    %c1_i32 = arith.constant 1 : i32
    %3 = arith.cmpi eq, %arg0, %c1_i32 : i32
    %4 = arith.extui %3 : i1 to i32
    %c0_i32_1 = arith.constant 0 : i32
    %5 = arith.cmpi ne, %4, %c0_i32_1 : i32
    scf.if %5 {
      %c0 = arith.constant 0 : index
      %c0_2 = arith.constant 0 : index
      %c0_3 = arith.constant 0 : index
      %6 = vector.load %arg2[%c0, %c0_2, %c0_3] : memref<32x16x1xf32, #tpu.memory_space<vmem>>, vector<32x16x1xf32>
      %7 = vector.shape_cast %6 : vector<32x16x1xf32> to vector<32x16x1xf32>
      %8 = vector.broadcast %7 : vector<32x16x1xf32> to vector<32x16x16xf32>
      %c0_4 = arith.constant 0 : index
      %c0_5 = arith.constant 0 : index
      %c0_6 = arith.constant 0 : index
      %9 = vector.load %arg3[%c0_4, %c0_5, %c0_6] : memref<32x16x16xf32, #tpu.memory_space<vmem>>, vector<32x16x16xf32>
      tpu.vector_store %arg3[%c0_4, %c0_5, %c0_6], %8 {strides = array<i32>} : memref<32x16x16xf32, #tpu.memory_space<vmem>>, vector<32x16x16xf32>,
    } else {
    }
    return
  }
  func.func @transform_0(%arg0: i32) -> (i32, i32, i32) {
    %c0_i32 = arith.constant 0 : i32
    %c0_i32_0 = arith.constant 0 : i32
    %c0_i32_1 = arith.constant 0 : i32
    %c0_i32_2 = arith.constant 0 : i32
    return %c0_i32, %c0_i32_0, %c0_i32_1 : i32, i32, i32
  }
  func.func @transform_1(%arg0: i32) -> (i32, i32, i32) {
    %c0_i32 = arith.constant 0 : i32
    %c0_i32_0 = arith.constant 0 : i32
    %c0_i32_1 = arith.constant 0 : i32
    %c0_i32_2 = arith.constant 0 : i32
    return %c0_i32, %c0_i32_0, %c0_i32_1 : i32, i32, i32
  }
  func.func @transform_2(%arg0: i32) -> (i32, i32, i32) {
    %c0_i32 = arith.constant 0 : i32
    %c0_i32_0 = arith.constant 0 : i32
    %c0_i32_1 = arith.constant 0 : i32
    return %arg0, %c0_i32, %c0_i32_0 : i32, i32, i32
  }
}

</mosaic_0001>

<llo_original>
// kernel: position_embedding_slab.1
$region0: #{position_embedding_slab.1}
  #allocation0 [shape = 'u32[]', space=smem, size = 0x4, offset = 0x4, fixed_abs, tag = 'smem constant byte address 0x4 - core index']
  #allocation1 [shape = 'u32[144,128]{1,0:T(1,128)}', space=vmem, size = 0x12000, scoped, tag = 'internal scratch']
  %s0 = inlined_call_operand.vmem [shape: f32[32,1,16], index: 0, kind: input, shape index: {}]
  %s1 = inlined_call_operand.vmem [shape: f32[32,16,1], index: 1, kind: input, shape index: {}]
  %s2 = inlined_call_operand.vmem [shape: f32[64,16,16], index: 2, kind: output, shape index: {}]
  %s3 = sld [smem:[#allocation0]]
  $region49: #{position_embedding_slab.1} parent=0
    _
  %s5 = ssub.s32 1, %s3
  %s6 = scalar_select 0, %s5, %s3
  loop: start=0, step=1, limit=4
  $region2: #{position_embedding_slab.1} parent=0 // loop_pre_header
    _
  $region3: #{position_embedding_slab.1} parent=0 // loop_header
    %s8 = sphi 0, %s12
    %p9 = scmp.ge.s32.totalorder %s8, 4
    %s16 = sphi 0, %s16
    %s18 = sphi 0, %s16
    %s19 = sphi 0, %s18
    %s33 = sphi 0, %s19
    %s37 = sphi 0, %s37
    %s39 = sphi 0, %s37
    %s40 = sphi 0, %s39
    %s54 = sphi 0, %s40
    %s60 = sphi 0, %s62
    %s63 = sphi 0, %s60
    %s64 = sphi 0, %s63
    %s80 = sphi 0, %s64
  $region4: #{position_embedding_slab.1} parent=0 // loop_header_branch
    %11 = sbr.rel (%p9) target = $region8
  $region5: #{position_embedding_slab.1} parent=0 // loop_body
    %s13 = ssub.s32 %s8, 1
    %s14 = ssub.s32 %s8, 2
    %s15 = sadd.s32 %s8, 1
    %s17 = sadd.s32 %s16, 1
    %p20 = scmp.eq.s32.totalorder %s8, 1
    %p21 = scmp.ne.s32.totalorder %s16, %s18
    %p22 = scmp.eq.s32.totalorder %s8, 0
    %p23 = por %p21, %p22
    %p24 = scmp.ne.s32.totalorder %s16, %s18
    %p25 = scmp.eq.s32.totalorder %s13, 1
    %p26 = por %p24, %p25
    %p27 = scmp.ne.s32.totalorder %s18, %s19
    %p28 = scmp.eq.s32.totalorder %s13, 0
    %p29 = por %p27, %p28
    %p30 = scmp.ne.s32.totalorder %s18, %s19
    %p31 = scmp.eq.s32.totalorder %s14, 1
    %p32 = por %p30, %p31
    %p34 = scmp.ne.s32.totalorder %s19, %s33
    %p35 = scmp.eq.s32.totalorder %s14, 0
    %p36 = por %p34, %p35
    %s38 = sadd.s32 %s37, 1
    %p41 = scmp.eq.s32.totalorder %s8, 1
    %p42 = scmp.ne.s32.totalorder %s37, %s39
    %p43 = scmp.eq.s32.totalorder %s8, 0
    %p44 = por %p42, %p43
    %p45 = scmp.ne.s32.totalorder %s37, %s39
    %p46 = scmp.eq.s32.totalorder %s13, 1
    %p47 = por %p45, %p46
    %p48 = scmp.ne.s32.totalorder %s39, %s40
    %p49 = scmp.eq.s32.totalorder %s13, 0
    %p50 = por %p48, %p49
    %p51 = scmp.ne.s32.totalorder %s39, %s40
    %p52 = scmp.eq.s32.totalorder %s14, 1
    %p53 = por %p51, %p52
    %p55 = scmp.ne.s32.totalorder %s40, %s54
    %p56 = scmp.eq.s32.totalorder %s14, 0
    %p57 = por %p55, %p56
    %s58 = ssub.s32 %s8, %s15
    %p59 = scmp.eq.s32.totalorder %s58, 0
    %s61 = sadd.s32 %s60, 1
    %s62 = scalar_select %p59, %s60, %s61
    %p65 = pneg %p59
    %p66 = scmp.eq.s32.totalorder %s8, 1
    %p67 = por %p65, %p66
    %p68 = scmp.ne.s32.totalorder %s60, %s63
    %p69 = scmp.eq.s32.totalorder %s8, 0
    %p70 = por %p68, %p69
    %p71 = scmp.ne.s32.totalorder %s60, %s63
    %p72 = scmp.eq.s32.totalorder %s13, 1
    %p73 = por %p71, %p72
    %p74 = scmp.ne.s32.totalorder %s63, %s64
    %p75 = scmp.eq.s32.totalorder %s13, 0
    %p76 = por %p74, %p75
    %p77 = scmp.ne.s32.totalorder %s63, %s64
    %p78 = scmp.eq.s32.totalorder %s14, 1
    %p79 = por %p77, %p78
    %p81 = scmp.ne.s32.totalorder %s64, %s80
    %p82 = scmp.eq.s32.totalorder %s14, 0
    %p83 = por %p81, %p82
    %p84 = scmp.le.s32.totalorder 1, %s8
    %p85 = scmp.lt.s32.totalorder %s8, 3
    %p86 = pnand %p84, %p85
    %p87 = pneg %p86
    // Predicated region
    $region9: #{position_embedding_slab.1} parent=5 // pred_check
      _
    $region10: #{position_embedding_slab.1} parent=5 // pred_check_branch
      %89 = sbr.rel (%p86) target = $region12
    $region11: #{position_embedding_slab.1} parent=5 // pred_region
      %s90 = ssub.s32 %s8, 1
      // Predicated region
      $region13: #{position_embedding_slab.1} parent=11 // pred_check
        %p91 = pneg %p29
      $region14: #{position_embedding_slab.1} parent=11 // pred_check_branch
        %93 = sbr.rel (%p91) target = $region16
      $region15: #{position_embedding_slab.1} parent=11 // pred_region
        _
      $region16: #{position_embedding_slab.1} parent=11 // pred_fallthru
        _
      // Predicated region
      $region17: #{position_embedding_slab.1} parent=11 // pred_check
        %p94 = pneg %p50
      $region18: #{position_embedding_slab.1} parent=11 // pred_check_branch
        %96 = sbr.rel (%p94) target = $region20
      $region19: #{position_embedding_slab.1} parent=11 // pred_region
        _
      $region20: #{position_embedding_slab.1} parent=11 // pred_fallthru
        _
    $region12: #{position_embedding_slab.1} parent=5 // pred_fallthru
      _
    %p97 = scmp.lt.s32.totalorder %s8, 2
    // Predicated region
    $region21: #{position_embedding_slab.1} parent=5 // pred_check
      %p98 = pneg %p97
    $region22: #{position_embedding_slab.1} parent=5 // pred_check_branch
      %100 = sbr.rel (%p98) target = $region24
    $region23: #{position_embedding_slab.1} parent=5 // pred_region
      _
    $region24: #{position_embedding_slab.1} parent=5 // pred_fallthru
      _
    %p101 = scmp.le.s32.totalorder 1, %s8
    %p102 = scmp.lt.s32.totalorder %s8, 3
    %p103 = pnand %p101, %p102
    %p104 = pneg %p103
    // Predicated region
    $region25: #{position_embedding_slab.1} parent=5 // pred_check
      _
    $region26: #{position_embedding_slab.1} parent=5 // pred_check_branch
      %106 = sbr.rel (%p103) target = $region28
    $region27: #{position_embedding_slab.1} parent=5 // pred_region
      %s107 = ssub.s32 %s8, 1
      %p108 = pneg %p29
      %p109 = pneg %p26
      %p110 = pneg %p50
      %p111 = pneg %p47
      %p112 = pneg %p76
      %p113 = pneg %p73
      %s114 = smul.u32 32, %s13
      %p115 = scmp.lt.s32.totalorder %s114, 63
      %s116 = scalar_select %p115, %s114, 63
      %s117 = smul.addr %s116, 2
      %s118 = smul.addr %s117, 8
      %s119 = scalar_lea.vmem %s2, %s118
      %s120 = smul.u32 32, %s13
      %p121 = scmp.lt.s32.totalorder %s120, 63
      %s122 = scalar_select %p121, %s120, 63
      %s123 = smul.addr %s122, 2
      %s124 = smul.addr %s123, 8
      %s125 = scalar_lea.vmem %s2, %s124
      %s126 = smul.u32 32, %s13
      %p127 = scmp.eq.s32.totalorder %s13, 0
      // Predicated region
      $region29: #{position_embedding_slab.1} parent=27 // pred_check
        %p128 = pneg %p127
      $region30: #{position_embedding_slab.1} parent=27 // pred_check_branch
        %130 = sbr.rel (%p128) target = $region32
      $region31: #{position_embedding_slab.1} parent=27 // pred_region
        %v131 = vld [vmem:[%s0] sm:$0x1]
        %v132 = vld [vmem:[%s0 + $0x1] sm:$0x1]
        %v133 = vld [vmem:[%s0 + $0x2] sm:$0x1]
        %v134 = vld [vmem:[%s0 + $0x3] sm:$0x1]
        %v135 = vld [vmem:[%s0 + $0x4] sm:$0x1]
        %v136 = vld [vmem:[%s0 + $0x5] sm:$0x1]
        %v137 = vld [vmem:[%s0 + $0x6] sm:$0x1]
        %v138 = vld [vmem:[%s0 + $0x7] sm:$0x1]
        %v139 = vld [vmem:[%s0 + $0x8] sm:$0x1]
        %v140 = vld [vmem:[%s0 + $0x9] sm:$0x1]
        %v141 = vld [vmem:[%s0 + $0xa] sm:$0x1]
        %v142 = vld [vmem:[%s0 + $0xb] sm:$0x1]
        %v143 = vld [vmem:[%s0 + $0xc] sm:$0x1]
        %v144 = vld [vmem:[%s0 + $0xd] sm:$0x1]
        %v145 = vld [vmem:[%s0 + $0xe] sm:$0x1]
        %v146 = vld [vmem:[%s0 + $0xf] sm:$0x1]
        %v147 = vld [vmem:[%s0 + $0x10] sm:$0x1]
        %v148 = vld [vmem:[%s0 + $0x11] sm:$0x1]
        %v149 = vld [vmem:[%s0 + $0x12] sm:$0x1]
        %v150 = vld [vmem:[%s0 + $0x13] sm:$0x1]
        %v151 = vld [vmem:[%s0 + $0x14] sm:$0x1]
        %v152 = vld [vmem:[%s0 + $0x15] sm:$0x1]
        %v153 = vld [vmem:[%s0 + $0x16] sm:$0x1]
        %v154 = vld [vmem:[%s0 + $0x17] sm:$0x1]
        %v155 = vld [vmem:[%s0 + $0x18] sm:$0x1]
        %v156 = vld [vmem:[%s0 + $0x19] sm:$0x1]
        %v157 = vld [vmem:[%s0 + $0x1a] sm:$0x1]
        %v158 = vld [vmem:[%s0 + $0x1b] sm:$0x1]
        %v159 = vld [vmem:[%s0 + $0x1c] sm:$0x1]
        %v160 = vld [vmem:[%s0 + $0x1d] sm:$0x1]
        %v161 = vld [vmem:[%s0 + $0x1e] sm:$0x1]
        %v162 = vld [vmem:[%s0 + $0x1f] sm:$0x1]
        %v195 = vlaneseq
        %v196 = vshrl.u32 %v195, 7
        %v197 = vsub.s32 0, %v196
        %v198 = vrot.slane %v131, %v197
        %v199 = vlaneseq
        %v200 = vshrl.u32 %v199, 7
        %v201 = vsub.s32 0, %v200
        %v202 = vrot.slane %v132, %v201
        %v203 = vlaneseq
        %v204 = vshrl.u32 %v203, 7
        %v205 = vsub.s32 0, %v204
        %v206 = vrot.slane %v133, %v205
        %v207 = vlaneseq
        %v208 = vshrl.u32 %v207, 7
        %v209 = vsub.s32 0, %v208
        %v210 = vrot.slane %v134, %v209
        %v211 = vlaneseq
        %v212 = vshrl.u32 %v211, 7
        %v213 = vsub.s32 0, %v212
        %v214 = vrot.slane %v135, %v213
        %v215 = vlaneseq
        %v216 = vshrl.u32 %v215, 7
        %v217 = vsub.s32 0, %v216
        %v218 = vrot.slane %v136, %v217
        %v219 = vlaneseq
        %v220 = vshrl.u32 %v219, 7
        %v221 = vsub.s32 0, %v220
        %v222 = vrot.slane %v137, %v221
        %v223 = vlaneseq
        %v224 = vshrl.u32 %v223, 7
        %v225 = vsub.s32 0, %v224
        %v226 = vrot.slane %v138, %v225
        %v227 = vlaneseq
        %v228 = vshrl.u32 %v227, 7
        %v229 = vsub.s32 0, %v228
        %v230 = vrot.slane %v139, %v229
        %v231 = vlaneseq
        %v232 = vshrl.u32 %v231, 7
        %v233 = vsub.s32 0, %v232
        %v234 = vrot.slane %v140, %v233
        %v235 = vlaneseq
        %v236 = vshrl.u32 %v235, 7
        %v237 = vsub.s32 0, %v236
        %v238 = vrot.slane %v141, %v237
        %v239 = vlaneseq
        %v240 = vshrl.u32 %v239, 7
        %v241 = vsub.s32 0, %v240
        %v242 = vrot.slane %v142, %v241
        %v243 = vlaneseq
        %v244 = vshrl.u32 %v243, 7
        %v245 = vsub.s32 0, %v244
        %v246 = vrot.slane %v143, %v245
        %v247 = vlaneseq
        %v248 = vshrl.u32 %v247, 7
        %v249 = vsub.s32 0, %v248
        %v250 = vrot.slane %v144, %v249
        %v251 = vlaneseq
        %v252 = vshrl.u32 %v251, 7
        %v253 = vsub.s32 0, %v252
        %v254 = vrot.slane %v145, %v253
        %v255 = vlaneseq
        %v256 = vshrl.u32 %v255, 7
        %v257 = vsub.s32 0, %v256
        %v258 = vrot.slane %v146, %v257
        %v259 = vlaneseq
        %v260 = vshrl.u32 %v259, 7
        %v261 = vsub.s32 0, %v260
        %v262 = vrot.slane %v147, %v261
        %v263 = vlaneseq
        %v264 = vshrl.u32 %v263, 7
        %v265 = vsub.s32 0, %v264
        %v266 = vrot.slane %v148, %v265
        %v267 = vlaneseq
        %v268 = vshrl.u32 %v267, 7
        %v269 = vsub.s32 0, %v268
        %v270 = vrot.slane %v149, %v269
        %v271 = vlaneseq
        %v272 = vshrl.u32 %v271, 7
        %v273 = vsub.s32 0, %v272
        %v274 = vrot.slane %v150, %v273
        %v275 = vlaneseq
        %v276 = vshrl.u32 %v275, 7
        %v277 = vsub.s32 0, %v276
        %v278 = vrot.slane %v151, %v277
        %v279 = vlaneseq
        %v280 = vshrl.u32 %v279, 7
        %v281 = vsub.s32 0, %v280
        %v282 = vrot.slane %v152, %v281
        %v283 = vlaneseq
        %v284 = vshrl.u32 %v283, 7
        %v285 = vsub.s32 0, %v284
        %v286 = vrot.slane %v153, %v285
        %v287 = vlaneseq
        %v288 = vshrl.u32 %v287, 7
        %v289 = vsub.s32 0, %v288
        %v290 = vrot.slane %v154, %v289
        %v291 = vlaneseq
        %v292 = vshrl.u32 %v291, 7
        %v293 = vsub.s32 0, %v292
        %v294 = vrot.slane %v155, %v293
        %v295 = vlaneseq
        %v296 = vshrl.u32 %v295, 7
        %v297 = vsub.s32 0, %v296
        %v298 = vrot.slane %v156, %v297
        %v299 = vlaneseq
        %v300 = vshrl.u32 %v299, 7
        %v301 = vsub.s32 0, %v300
        %v302 = vrot.slane %v157, %v301
        %v303 = vlaneseq
        %v304 = vshrl.u32 %v303, 7
        %v305 = vsub.s32 0, %v304
        %v306 = vrot.slane %v158, %v305
        %v307 = vlaneseq
        %v308 = vshrl.u32 %v307, 7
        %v309 = vsub.s32 0, %v308
        %v310 = vrot.slane %v159, %v309
        %v311 = vlaneseq
        %v312 = vshrl.u32 %v311, 7
        %v313 = vsub.s32 0, %v312
        %v314 = vrot.slane %v160, %v313
        %v315 = vlaneseq
        %v316 = vshrl.u32 %v315, 7
        %v317 = vsub.s32 0, %v316
        %v318 = vrot.slane %v161, %v317
        %v319 = vlaneseq
        %v320 = vshrl.u32 %v319, 7
        %v321 = vsub.s32 0, %v320
        %v322 = vrot.slane %v162, %v321
        %vm355 = vcmask 130048
        %356 = vst.msk [vmem:[%s125] sm:$0xff] %vm355, %v198
        %357 = vst.msk [vmem:[%s125 + $0x8] sm:$0xff] %vm355, %v198
        %358 = vst.msk [vmem:[%s125 + $0x10] sm:$0xff] %vm355, %v202
        %359 = vst.msk [vmem:[%s125 + $0x18] sm:$0xff] %vm355, %v202
        %360 = vst.msk [vmem:[%s125 + $0x20] sm:$0xff] %vm355, %v206
        %361 = vst.msk [vmem:[%s125 + $0x28] sm:$0xff] %vm355, %v206
        %362 = vst.msk [vmem:[%s125 + $0x30] sm:$0xff] %vm355, %v210
        %363 = vst.msk [vmem:[%s125 + $0x38] sm:$0xff] %vm355, %v210
        %364 = vst.msk [vmem:[%s125 + $0x40] sm:$0xff] %vm355, %v214
        %365 = vst.msk [vmem:[%s125 + $0x48] sm:$0xff] %vm355, %v214
        %366 = vst.msk [vmem:[%s125 + $0x50] sm:$0xff] %vm355, %v218
        %367 = vst.msk [vmem:[%s125 + $0x58] sm:$0xff] %vm355, %v218
        %368 = vst.msk [vmem:[%s125 + $0x60] sm:$0xff] %vm355, %v222
        %369 = vst.msk [vmem:[%s125 + $0x68] sm:$0xff] %vm355, %v222
        %370 = vst.msk [vmem:[%s125 + $0x70] sm:$0xff] %vm355, %v226
        %371 = vst.msk [vmem:[%s125 + $0x78] sm:$0xff] %vm355, %v226
        %372 = vst.msk [vmem:[%s125 + $0x80] sm:$0xff] %vm355, %v230
        %373 = vst.msk [vmem:[%s125 + $0x88] sm:$0xff] %vm355, %v230
        %374 = vst.msk [vmem:[%s125 + $0x90] sm:$0xff] %vm355, %v234
        %375 = vst.msk [vmem:[%s125 + $0x98] sm:$0xff] %vm355, %v234
        %376 = vst.msk [vmem:[%s125 + $0xa0] sm:$0xff] %vm355, %v238
        %377 = vst.msk [vmem:[%s125 + $0xa8] sm:$0xff] %vm355, %v238
        %378 = vst.msk [vmem:[%s125 + $0xb0] sm:$0xff] %vm355, %v242
        %379 = vst.msk [vmem:[%s125 + $0xb8] sm:$0xff] %vm355, %v242
        %380 = vst.msk [vmem:[%s125 + $0xc0] sm:$0xff] %vm355, %v246
        %381 = vst.msk [vmem:[%s125 + $0xc8] sm:$0xff] %vm355, %v246
        %382 = vst.msk [vmem:[%s125 + $0xd0] sm:$0xff] %vm355, %v250
        %383 = vst.msk [vmem:[%s125 + $0xd8] sm:$0xff] %vm355, %v250
        %384 = vst.msk [vmem:[%s125 + $0xe0] sm:$0xff] %vm355, %v254
        %385 = vst.msk [vmem:[%s125 + $0xe8] sm:$0xff] %vm355, %v254
        %386 = vst.msk [vmem:[%s125 + $0xf0] sm:$0xff] %vm355, %v258
        %387 = vst.msk [vmem:[%s125 + $0xf8] sm:$0xff] %vm355, %v258
        %388 = vst.msk [vmem:[%s125 + $0x100] sm:$0xff] %vm355, %v262
        %389 = vst.msk [vmem:[%s125 + $0x108] sm:$0xff] %vm355, %v262
        %390 = vst.msk [vmem:[%s125 + $0x110] sm:$0xff] %vm355, %v266
        %391 = vst.msk [vmem:[%s125 + $0x118] sm:$0xff] %vm355, %v266
        %392 = vst.msk [vmem:[%s125 + $0x120] sm:$0xff] %vm355, %v270
        %393 = vst.msk [vmem:[%s125 + $0x128] sm:$0xff] %vm355, %v270
        %394 = vst.msk [vmem:[%s125 + $0x130] sm:$0xff] %vm355, %v274
        %395 = vst.msk [vmem:[%s125 + $0x138] sm:$0xff] %vm355, %v274
        %396 = vst.msk [vmem:[%s125 + $0x140] sm:$0xff] %vm355, %v278
        %397 = vst.msk [vmem:[%s125 + $0x148] sm:$0xff] %vm355, %v278
        %398 = vst.msk [vmem:[%s125 + $0x150] sm:$0xff] %vm355, %v282
        %399 = vst.msk [vmem:[%s125 + $0x158] sm:$0xff] %vm355, %v282
        %400 = vst.msk [vmem:[%s125 + $0x160] sm:$0xff] %vm355, %v286
        %401 = vst.msk [vmem:[%s125 + $0x168] sm:$0xff] %vm355, %v286
        %402 = vst.msk [vmem:[%s125 + $0x170] sm:$0xff] %vm355, %v290
        %403 = vst.msk [vmem:[%s125 + $0x178] sm:$0xff] %vm355, %v290
        %404 = vst.msk [vmem:[%s125 + $0x180] sm:$0xff] %vm355, %v294
        %405 = vst.msk [vmem:[%s125 + $0x188] sm:$0xff] %vm355, %v294
        %406 = vst.msk [vmem:[%s125 + $0x190] sm:$0xff] %vm355, %v298
        %407 = vst.msk [vmem:[%s125 + $0x198] sm:$0xff] %vm355, %v298
        %408 = vst.msk [vmem:[%s125 + $0x1a0] sm:$0xff] %vm355, %v302
        %409 = vst.msk [vmem:[%s125 + $0x1a8] sm:$0xff] %vm355, %v302
        %410 = vst.msk [vmem:[%s125 + $0x1b0] sm:$0xff] %vm355, %v306
        %411 = vst.msk [vmem:[%s125 + $0x1b8] sm:$0xff] %vm355, %v306
        %412 = vst.msk [vmem:[%s125 + $0x1c0] sm:$0xff] %vm355, %v310
        %413 = vst.msk [vmem:[%s125 + $0x1c8] sm:$0xff] %vm355, %v310
        %414 = vst.msk [vmem:[%s125 + $0x1d0] sm:$0xff] %vm355, %v314
        %415 = vst.msk [vmem:[%s125 + $0x1d8] sm:$0xff] %vm355, %v314
        %416 = vst.msk [vmem:[%s125 + $0x1e0] sm:$0xff] %vm355, %v318
        %417 = vst.msk [vmem:[%s125 + $0x1e8] sm:$0xff] %vm355, %v318
        %418 = vst.msk [vmem:[%s125 + $0x1f0] sm:$0xff] %vm355, %v322
        %419 = vst.msk [vmem:[%s125 + $0x1f8] sm:$0xff] %vm355, %v322
      $region32: #{position_embedding_slab.1} parent=27 // pred_fallthru
        _
      %p420 = scmp.eq.s32.totalorder %s13, 1
      // Predicated region
      $region33: #{position_embedding_slab.1} parent=27 // pred_check
        %p421 = pneg %p420
      $region34: #{position_embedding_slab.1} parent=27 // pred_check_branch
        %423 = sbr.rel (%p421) target = $region36
      $region35: #{position_embedding_slab.1} parent=27 // pred_region
        %v424 = vld [vmem:[%s1] sm:$0xff]
        %v425 = vld [vmem:[%s1 + $0x8] sm:$0xff]
        %v426 = vld [vmem:[%s1 + $0x10] sm:$0xff]
        %v427 = vld [vmem:[%s1 + $0x18] sm:$0xff]
        %v428 = vld [vmem:[%s1 + $0x20] sm:$0xff]
        %v429 = vld [vmem:[%s1 + $0x28] sm:$0xff]
        %v430 = vld [vmem:[%s1 + $0x30] sm:$0xff]
        %v431 = vld [vmem:[%s1 + $0x38] sm:$0xff]
        %v432 = vld [vmem:[%s1 + $0x40] sm:$0xff]
        %v433 = vld [vmem:[%s1 + $0x48] sm:$0xff]
        %v434 = vld [vmem:[%s1 + $0x50] sm:$0xff]
        %v435 = vld [vmem:[%s1 + $0x58] sm:$0xff]
        %v436 = vld [vmem:[%s1 + $0x60] sm:$0xff]
        %v437 = vld [vmem:[%s1 + $0x68] sm:$0xff]
        %v438 = vld [vmem:[%s1 + $0x70] sm:$0xff]
        %v439 = vld [vmem:[%s1 + $0x78] sm:$0xff]
        %v440 = vld [vmem:[%s1 + $0x80] sm:$0xff]
        %v441 = vld [vmem:[%s1 + $0x88] sm:$0xff]
        %v442 = vld [vmem:[%s1 + $0x90] sm:$0xff]
        %v443 = vld [vmem:[%s1 + $0x98] sm:$0xff]
        %v444 = vld [vmem:[%s1 + $0xa0] sm:$0xff]
        %v445 = vld [vmem:[%s1 + $0xa8] sm:$0xff]
        %v446 = vld [vmem:[%s1 + $0xb0] sm:$0xff]
        %v447 = vld [vmem:[%s1 + $0xb8] sm:$0xff]
        %v448 = vld [vmem:[%s1 + $0xc0] sm:$0xff]
        %v449 = vld [vmem:[%s1 + $0xc8] sm:$0xff]
        %v450 = vld [vmem:[%s1 + $0xd0] sm:$0xff]
        %v451 = vld [vmem:[%s1 + $0xd8] sm:$0xff]
        %v452 = vld [vmem:[%s1 + $0xe0] sm:$0xff]
        %v453 = vld [vmem:[%s1 + $0xe8] sm:$0xff]
        %v454 = vld [vmem:[%s1 + $0xf0] sm:$0xff]
        %v455 = vld [vmem:[%s1 + $0xf8] sm:$0xff]
        %v456 = vld [vmem:[%s1 + $0x100] sm:$0xff]
        %v457 = vld [vmem:[%s1 + $0x108] sm:$0xff]
        %v458 = vld [vmem:[%s1 + $0x110] sm:$0xff]
        %v459 = vld [vmem:[%s1 + $0x118] sm:$0xff]
        %v460 = vld [vmem:[%s1 + $0x120] sm:$0xff]
        %v461 = vld [vmem:[%s1 + $0x128] sm:$0xff]
        %v462 = vld [vmem:[%s1 + $0x130] sm:$0xff]
        %v463 = vld [vmem:[%s1 + $0x138] sm:$0xff]
        %v464 = vld [vmem:[%s1 + $0x140] sm:$0xff]
        %v465 = vld [vmem:[%s1 + $0x148] sm:$0xff]
        %v466 = vld [vmem:[%s1 + $0x150] sm:$0xff]
        %v467 = vld [vmem:[%s1 + $0x158] sm:$0xff]
        %v468 = vld [vmem:[%s1 + $0x160] sm:$0xff]
        %v469 = vld [vmem:[%s1 + $0x168] sm:$0xff]
        %v470 = vld [vmem:[%s1 + $0x170] sm:$0xff]
        %v471 = vld [vmem:[%s1 + $0x178] sm:$0xff]
        %v472 = vld [vmem:[%s1 + $0x180] sm:$0xff]
        %v473 = vld [vmem:[%s1 + $0x188] sm:$0xff]
        %v474 = vld [vmem:[%s1 + $0x190] sm:$0xff]
        %v475 = vld [vmem:[%s1 + $0x198] sm:$0xff]
        %v476 = vld [vmem:[%s1 + $0x1a0] sm:$0xff]
        %v477 = vld [vmem:[%s1 + $0x1a8] sm:$0xff]
        %v478 = vld [vmem:[%s1 + $0x1b0] sm:$0xff]
        %v479 = vld [vmem:[%s1 + $0x1b8] sm:$0xff]
        %v480 = vld [vmem:[%s1 + $0x1c0] sm:$0xff]
        %v481 = vld [vmem:[%s1 + $0x1c8] sm:$0xff]
        %v482 = vld [vmem:[%s1 + $0x1d0] sm:$0xff]
        %v483 = vld [vmem:[%s1 + $0x1d8] sm:$0xff]
        %v484 = vld [vmem:[%s1 + $0x1e0] sm:$0xff]
        %v485 = vld [vmem:[%s1 + $0x1e8] sm:$0xff]
        %v486 = vld [vmem:[%s1 + $0x1f0] sm:$0xff]
        %v487 = vld [vmem:[%s1 + $0x1f8] sm:$0xff]
        %489 = vset.pattern.permute.xlu0 0
        %490 = vperm.xlu0 %489, %v424
        %v491 = vpop.permute.xlu0 %490
        %494 = vset.pattern.permute.xlu0 0
        %495 = vperm.xlu0 %494, %v425
        %v496 = vpop.permute.xlu0 %495
        %499 = vset.pattern.permute.xlu0 0
        %500 = vperm.xlu0 %499, %v426
        %v501 = vpop.permute.xlu0 %500
        %504 = vset.pattern.permute.xlu0 0
        %505 = vperm.xlu0 %504, %v427
        %v506 = vpop.permute.xlu0 %505
        %509 = vset.pattern.permute.xlu0 0
        %510 = vperm.xlu0 %509, %v428
        %v511 = vpop.permute.xlu0 %510
        %514 = vset.pattern.permute.xlu0 0
        %515 = vperm.xlu0 %514, %v429
        %v516 = vpop.permute.xlu0 %515
        %519 = vset.pattern.permute.xlu0 0
        %520 = vperm.xlu0 %519, %v430
        %v521 = vpop.permute.xlu0 %520
        %524 = vset.pattern.permute.xlu0 0
        %525 = vperm.xlu0 %524, %v431
        %v526 = vpop.permute.xlu0 %525
        %529 = vset.pattern.permute.xlu0 0
        %530 = vperm.xlu0 %529, %v432
        %v531 = vpop.permute.xlu0 %530
        %534 = vset.pattern.permute.xlu0 0
        %535 = vperm.xlu0 %534, %v433
        %v536 = vpop.permute.xlu0 %535
        %539 = vset.pattern.permute.xlu0 0
        %540 = vperm.xlu0 %539, %v434
        %v541 = vpop.permute.xlu0 %540
        %544 = vset.pattern.permute.xlu0 0
        %545 = vperm.xlu0 %544, %v435
        %v546 = vpop.permute.xlu0 %545
        %549 = vset.pattern.permute.xlu0 0
        %550 = vperm.xlu0 %549, %v436
        %v551 = vpop.permute.xlu0 %550
        %554 = vset.pattern.permute.xlu0 0
        %555 = vperm.xlu0 %554, %v437
        %v556 = vpop.permute.xlu0 %555
        %559 = vset.pattern.permute.xlu0 0
        %560 = vperm.xlu0 %559, %v438
        %v561 = vpop.permute.xlu0 %560
        %564 = vset.pattern.permute.xlu0 0
        %565 = vperm.xlu0 %564, %v439
        %v566 = vpop.permute.xlu0 %565
        %569 = vset.pattern.permute.xlu0 0
        %570 = vperm.xlu0 %569, %v440
        %v571 = vpop.permute.xlu0 %570
        %574 = vset.pattern.permute.xlu0 0
        %575 = vperm.xlu0 %574, %v441
        %v576 = vpop.permute.xlu0 %575
        %579 = vset.pattern.permute.xlu0 0
        %580 = vperm.xlu0 %579, %v442
        %v581 = vpop.permute.xlu0 %580
        %584 = vset.pattern.permute.xlu0 0
        %585 = vperm.xlu0 %584, %v443
        %v586 = vpop.permute.xlu0 %585
        %589 = vset.pattern.permute.xlu0 0
        %590 = vperm.xlu0 %589, %v444
        %v591 = vpop.permute.xlu0 %590
        %594 = vset.pattern.permute.xlu0 0
        %595 = vperm.xlu0 %594, %v445
        %v596 = vpop.permute.xlu0 %595
        %599 = vset.pattern.permute.xlu0 0
        %600 = vperm.xlu0 %599, %v446
        %v601 = vpop.permute.xlu0 %600
        %604 = vset.pattern.permute.xlu0 0
        %605 = vperm.xlu0 %604, %v447
        %v606 = vpop.permute.xlu0 %605
        %609 = vset.pattern.permute.xlu0 0
        %610 = vperm.xlu0 %609, %v448
        %v611 = vpop.permute.xlu0 %610
        %614 = vset.pattern.permute.xlu0 0
        %615 = vperm.xlu0 %614, %v449
        %v616 = vpop.permute.xlu0 %615
        %619 = vset.pattern.permute.xlu0 0
        %620 = vperm.xlu0 %619, %v450
        %v621 = vpop.permute.xlu0 %620
        %624 = vset.pattern.permute.xlu0 0
        %625 = vperm.xlu0 %624, %v451
        %v626 = vpop.permute.xlu0 %625
        %629 = vset.pattern.permute.xlu0 0
        %630 = vperm.xlu0 %629, %v452
        %v631 = vpop.permute.xlu0 %630
        %634 = vset.pattern.permute.xlu0 0
        %635 = vperm.xlu0 %634, %v453
        %v636 = vpop.permute.xlu0 %635
        %639 = vset.pattern.permute.xlu0 0
        %640 = vperm.xlu0 %639, %v454
        %v641 = vpop.permute.xlu0 %640
        %644 = vset.pattern.permute.xlu0 0
        %645 = vperm.xlu0 %644, %v455
        %v646 = vpop.permute.xlu0 %645
        %649 = vset.pattern.permute.xlu0 0
        %650 = vperm.xlu0 %649, %v456
        %v651 = vpop.permute.xlu0 %650
        %654 = vset.pattern.permute.xlu0 0
        %655 = vperm.xlu0 %654, %v457
        %v656 = vpop.permute.xlu0 %655
        %659 = vset.pattern.permute.xlu0 0
        %660 = vperm.xlu0 %659, %v458
        %v661 = vpop.permute.xlu0 %660
        %664 = vset.pattern.permute.xlu0 0
        %665 = vperm.xlu0 %664, %v459
        %v666 = vpop.permute.xlu0 %665
        %669 = vset.pattern.permute.xlu0 0
        %670 = vperm.xlu0 %669, %v460
        %v671 = vpop.permute.xlu0 %670
        %674 = vset.pattern.permute.xlu0 0
        %675 = vperm.xlu0 %674, %v461
        %v676 = vpop.permute.xlu0 %675
        %679 = vset.pattern.permute.xlu0 0
        %680 = vperm.xlu0 %679, %v462
        %v681 = vpop.permute.xlu0 %680
        %684 = vset.pattern.permute.xlu0 0
        %685 = vperm.xlu0 %684, %v463
        %v686 = vpop.permute.xlu0 %685
        %689 = vset.pattern.permute.xlu0 0
        %690 = vperm.xlu0 %689, %v464
        %v691 = vpop.permute.xlu0 %690
        %694 = vset.pattern.permute.xlu0 0
        %695 = vperm.xlu0 %694, %v465
        %v696 = vpop.permute.xlu0 %695
        %699 = vset.pattern.permute.xlu0 0
        %700 = vperm.xlu0 %699, %v466
        %v701 = vpop.permute.xlu0 %700
        %704 = vset.pattern.permute.xlu0 0
        %705 = vperm.xlu0 %704, %v467
        %v706 = vpop.permute.xlu0 %705
        %709 = vset.pattern.permute.xlu0 0
        %710 = vperm.xlu0 %709, %v468
        %v711 = vpop.permute.xlu0 %710
        %714 = vset.pattern.permute.xlu0 0
        %715 = vperm.xlu0 %714, %v469
        %v716 = vpop.permute.xlu0 %715
        %719 = vset.pattern.permute.xlu0 0
        %720 = vperm.xlu0 %719, %v470
        %v721 = vpop.permute.xlu0 %720
        %724 = vset.pattern.permute.xlu0 0
        %725 = vperm.xlu0 %724, %v471
        %v726 = vpop.permute.xlu0 %725
        %729 = vset.pattern.permute.xlu0 0
        %730 = vperm.xlu0 %729, %v472
        %v731 = vpop.permute.xlu0 %730
        %734 = vset.pattern.permute.xlu0 0
        %735 = vperm.xlu0 %734, %v473
        %v736 = vpop.permute.xlu0 %735
        %739 = vset.pattern.permute.xlu0 0
        %740 = vperm.xlu0 %739, %v474
        %v741 = vpop.permute.xlu0 %740
        %744 = vset.pattern.permute.xlu0 0
        %745 = vperm.xlu0 %744, %v475
        %v746 = vpop.permute.xlu0 %745
        %749 = vset.pattern.permute.xlu0 0
        %750 = vperm.xlu0 %749, %v476
        %v751 = vpop.permute.xlu0 %750
        %754 = vset.pattern.permute.xlu0 0
        %755 = vperm.xlu0 %754, %v477
        %v756 = vpop.permute.xlu0 %755
        %759 = vset.pattern.permute.xlu0 0
        %760 = vperm.xlu0 %759, %v478
        %v761 = vpop.permute.xlu0 %760
        %764 = vset.pattern.permute.xlu0 0
        %765 = vperm.xlu0 %764, %v479
        %v766 = vpop.permute.xlu0 %765
        %769 = vset.pattern.permute.xlu0 0
        %770 = vperm.xlu0 %769, %v480
        %v771 = vpop.permute.xlu0 %770
        %774 = vset.pattern.permute.xlu0 0
        %775 = vperm.xlu0 %774, %v481
        %v776 = vpop.permute.xlu0 %775
        %779 = vset.pattern.permute.xlu0 0
        %780 = vperm.xlu0 %779, %v482
        %v781 = vpop.permute.xlu0 %780
        %784 = vset.pattern.permute.xlu0 0
        %785 = vperm.xlu0 %784, %v483
        %v786 = vpop.permute.xlu0 %785
        %789 = vset.pattern.permute.xlu0 0
        %790 = vperm.xlu0 %789, %v484
        %v791 = vpop.permute.xlu0 %790
        %794 = vset.pattern.permute.xlu0 0
        %795 = vperm.xlu0 %794, %v485
        %v796 = vpop.permute.xlu0 %795
        %799 = vset.pattern.permute.xlu0 0
        %800 = vperm.xlu0 %799, %v486
        %v801 = vpop.permute.xlu0 %800
        %804 = vset.pattern.permute.xlu0 0
        %805 = vperm.xlu0 %804, %v487
        %v806 = vpop.permute.xlu0 %805
        %vm808 = vcmask 130048
        %809 = vst.msk [vmem:[%s125] sm:$0xff] %vm808, %v491
        %810 = vst.msk [vmem:[%s125 + $0x8] sm:$0xff] %vm808, %v496
        %811 = vst.msk [vmem:[%s125 + $0x10] sm:$0xff] %vm808, %v501
        %812 = vst.msk [vmem:[%s125 + $0x18] sm:$0xff] %vm808, %v506
        %813 = vst.msk [vmem:[%s125 + $0x20] sm:$0xff] %vm808, %v511
        %814 = vst.msk [vmem:[%s125 + $0x28] sm:$0xff] %vm808, %v516
        %815 = vst.msk [vmem:[%s125 + $0x30] sm:$0xff] %vm808, %v521
        %816 = vst.msk [vmem:[%s125 + $0x38] sm:$0xff] %vm808, %v526
        %817 = vst.msk [vmem:[%s125 + $0x40] sm:$0xff] %vm808, %v531
        %818 = vst.msk [vmem:[%s125 + $0x48] sm:$0xff] %vm808, %v536
        %819 = vst.msk [vmem:[%s125 + $0x50] sm:$0xff] %vm808, %v541
        %820 = vst.msk [vmem:[%s125 + $0x58] sm:$0xff] %vm808, %v546
        %821 = vst.msk [vmem:[%s125 + $0x60] sm:$0xff] %vm808, %v551
        %822 = vst.msk [vmem:[%s125 + $0x68] sm:$0xff] %vm808, %v556
        %823 = vst.msk [vmem:[%s125 + $0x70] sm:$0xff] %vm808, %v561
        %824 = vst.msk [vmem:[%s125 + $0x78] sm:$0xff] %vm808, %v566
        %825 = vst.msk [vmem:[%s125 + $0x80] sm:$0xff] %vm808, %v571
        %826 = vst.msk [vmem:[%s125 + $0x88] sm:$0xff] %vm808, %v576
        %827 = vst.msk [vmem:[%s125 + $0x90] sm:$0xff] %vm808, %v581
        %828 = vst.msk [vmem:[%s125 + $0x98] sm:$0xff] %vm808, %v586
        %829 = vst.msk [vmem:[%s125 + $0xa0] sm:$0xff] %vm808, %v591
        %830 = vst.msk [vmem:[%s125 + $0xa8] sm:$0xff] %vm808, %v596
        %831 = vst.msk [vmem:[%s125 + $0xb0] sm:$0xff] %vm808, %v601
        %832 = vst.msk [vmem:[%s125 + $0xb8] sm:$0xff] %vm808, %v606
        %833 = vst.msk [vmem:[%s125 + $0xc0] sm:$0xff] %vm808, %v611
        %834 = vst.msk [vmem:[%s125 + $0xc8] sm:$0xff] %vm808, %v616
        %835 = vst.msk [vmem:[%s125 + $0xd0] sm:$0xff] %vm808, %v621
        %836 = vst.msk [vmem:[%s125 + $0xd8] sm:$0xff] %vm808, %v626
        %837 = vst.msk [vmem:[%s125 + $0xe0] sm:$0xff] %vm808, %v631
        %838 = vst.msk [vmem:[%s125 + $0xe8] sm:$0xff] %vm808, %v636
        %839 = vst.msk [vmem:[%s125 + $0xf0] sm:$0xff] %vm808, %v641
        %840 = vst.msk [vmem:[%s125 + $0xf8] sm:$0xff] %vm808, %v646
        %841 = vst.msk [vmem:[%s125 + $0x100] sm:$0xff] %vm808, %v651
        %842 = vst.msk [vmem:[%s125 + $0x108] sm:$0xff] %vm808, %v656
        %843 = vst.msk [vmem:[%s125 + $0x110] sm:$0xff] %vm808, %v661
        %844 = vst.msk [vmem:[%s125 + $0x118] sm:$0xff] %vm808, %v666
        %845 = vst.msk [vmem:[%s125 + $0x120] sm:$0xff] %vm808, %v671
        %846 = vst.msk [vmem:[%s125 + $0x128] sm:$0xff] %vm808, %v676
        %847 = vst.msk [vmem:[%s125 + $0x130] sm:$0xff] %vm808, %v681
        %848 = vst.msk [vmem:[%s125 + $0x138] sm:$0xff] %vm808, %v686
        %849 = vst.msk [vmem:[%s125 + $0x140] sm:$0xff] %vm808, %v691
        %850 = vst.msk [vmem:[%s125 + $0x148] sm:$0xff] %vm808, %v696
        %851 = vst.msk [vmem:[%s125 + $0x150] sm:$0xff] %vm808, %v701
        %852 = vst.msk [vmem:[%s125 + $0x158] sm:$0xff] %vm808, %v706
        %853 = vst.msk [vmem:[%s125 + $0x160] sm:$0xff] %vm808, %v711
        %854 = vst.msk [vmem:[%s125 + $0x168] sm:$0xff] %vm808, %v716
        %855 = vst.msk [vmem:[%s125 + $0x170] sm:$0xff] %vm808, %v721
        %856 = vst.msk [vmem:[%s125 + $0x178] sm:$0xff] %vm808, %v726
        %857 = vst.msk [vmem:[%s125 + $0x180] sm:$0xff] %vm808, %v731
        %858 = vst.msk [vmem:[%s125 + $0x188] sm:$0xff] %vm808, %v736
        %859 = vst.msk [vmem:[%s125 + $0x190] sm:$0xff] %vm808, %v741
        %860 = vst.msk [vmem:[%s125 + $0x198] sm:$0xff] %vm808, %v746
        %861 = vst.msk [vmem:[%s125 + $0x1a0] sm:$0xff] %vm808, %v751
        %862 = vst.msk [vmem:[%s125 + $0x1a8] sm:$0xff] %vm808, %v756
        %863 = vst.msk [vmem:[%s125 + $0x1b0] sm:$0xff] %vm808, %v761
        %864 = vst.msk [vmem:[%s125 + $0x1b8] sm:$0xff] %vm808, %v766
        %865 = vst.msk [vmem:[%s125 + $0x1c0] sm:$0xff] %vm808, %v771
        %866 = vst.msk [vmem:[%s125 + $0x1c8] sm:$0xff] %vm808, %v776
        %867 = vst.msk [vmem:[%s125 + $0x1d0] sm:$0xff] %vm808, %v781
        %868 = vst.msk [vmem:[%s125 + $0x1d8] sm:$0xff] %vm808, %v786
        %869 = vst.msk [vmem:[%s125 + $0x1e0] sm:$0xff] %vm808, %v791
        %870 = vst.msk [vmem:[%s125 + $0x1e8] sm:$0xff] %vm808, %v796
        %871 = vst.msk [vmem:[%s125 + $0x1f0] sm:$0xff] %vm808, %v801
        %872 = vst.msk [vmem:[%s125 + $0x1f8] sm:$0xff] %vm808, %v806
      $region36: #{position_embedding_slab.1} parent=27 // pred_fallthru
        _
      %s873 = smul.u32 32, %s13
      %p874 = scmp.lt.s32.totalorder %s873, 63
      %s875 = scalar_select %p874, %s873, 63
      %s876 = smul.addr %s875, 2
      %s877 = smul.addr %s876, 8
      %s878 = scalar_lea.vmem %s2, %s877
      // Predicated region
      $region37: #{position_embedding_slab.1} parent=27 // pred_check
        %p879 = pneg %p73
      $region38: #{position_embedding_slab.1} parent=27 // pred_check_branch
        %881 = sbr.rel (%p879) target = $region40
      $region39: #{position_embedding_slab.1} parent=27 // pred_region
        %s882 = smul.u32 32, %s13
      $region40: #{position_embedding_slab.1} parent=27 // pred_fallthru
        _
    $region28: #{position_embedding_slab.1} parent=5 // pred_fallthru
      _
    %p883 = scmp.le.s32.totalorder 2, %s8
    // Predicated region
    $region41: #{position_embedding_slab.1} parent=5 // pred_check
      %p884 = pneg %p883
    $region42: #{position_embedding_slab.1} parent=5 // pred_check_branch
      %886 = sbr.rel (%p884) target = $region44
    $region43: #{position_embedding_slab.1} parent=5 // pred_region
      %s887 = ssub.s32 %s8, 2
      // Predicated region
      $region45: #{position_embedding_slab.1} parent=43 // pred_check
        %p888 = pneg %p79
      $region46: #{position_embedding_slab.1} parent=43 // pred_check_branch
        %890 = sbr.rel (%p888) target = $region48
      $region47: #{position_embedding_slab.1} parent=43 // pred_region
        %s891 = smul.u32 32, %s14
        %p892 = scmp.lt.s32.totalorder %s891, 63
        %s893 = scalar_select %p892, %s891, 63
        %s894 = smul.addr %s893, 2
        %s895 = smul.addr %s894, 8
        %s896 = scalar_lea.vmem %s2, %s895
      $region48: #{position_embedding_slab.1} parent=43 // pred_fallthru
        _
    $region44: #{position_embedding_slab.1} parent=5 // pred_fallthru
      _
  $region6: #{position_embedding_slab.1} parent=0 // loop_footer
    %s12 = sadd.s32 1, %s8
  $region7: #{position_embedding_slab.1} parent=0 // loop_footer_branch
    %7 = sbr.rel target = $region3
  $region8: #{position_embedding_slab.1} parent=0 // loop_exit
    _

</llo_original>
